<compile_context>
chip_gen: v7x
topology: tpu7x:2x2x1
jax: 0.10.0
libtpu: 0.0.40
codegen_flags: <defaults>
</compile_context>

<pallas_src>
import jax
import jax.numpy as jnp
from jax.experimental import pallas as pl
from jax.experimental.pallas import tpu as pltpu

# --- synthetic "one_hot_encoding" vocabulary (module globals in the original) ---
ONE_HOT_ENCODING_LEN = 32          # one_hot_encoding_len
PAD_IDX = 0                        # one_hot_encoding['<pad>']
EMBED_DIM = 128                    # embed_dim

_TN_DIMS = (((0,), (0,)), ((), ()))   # contract dim 0 of both operands (lhs^T @ rhs)


def _embed_kernel(idx_ref, w3_ref, out_ref):
    """One grid step.

    idx_ref : (1, tm)   int32  token ids, lane-dense
    w3_ref  : (3, V, D) bf16   exact split: W == w3[0] + w3[1] + w3[2]
    out_ref : (tm, D)   f32 or bf16
    """
    idx = idx_ref[...]                                   # (1, tm)
    vocab = w3_ref.shape[1]
    tm = idx.shape[1]

    # One-hot^T, lane-dense: vocab on sublanes, tokens on lanes (VPU compare).
    iota = jax.lax.broadcasted_iota(jnp.int32, (vocab, tm), 0)
    onehot_t = (iota == idx).astype(jnp.bfloat16)        # (V, tm), exact in bf16

    if out_ref.dtype == jnp.bfloat16:
        # bf16 fast path: single MXU pass, half the HBM writeback.
        acc = jax.lax.dot_general(onehot_t, w3_ref[0], _TN_DIMS,
                                  preferred_element_type=jnp.float32)
        out_ref[...] = acc.astype(jnp.bfloat16)
    else:
        # Exact f32 gather in 3 single-pass bf16 matmuls (smallest plane first):
        # each dot selects one bf16 plane row exactly (one-hot => single
        # nonzero term, f32 accumulation), and hi+mid+lo reconstructs the f32
        # table row exactly.
        acc = jax.lax.dot_general(onehot_t, w3_ref[2], _TN_DIMS,
                                  preferred_element_type=jnp.float32)
        acc = acc + jax.lax.dot_general(onehot_t, w3_ref[1], _TN_DIMS,
                                        preferred_element_type=jnp.float32)
        acc = acc + jax.lax.dot_general(onehot_t, w3_ref[0], _TN_DIMS,
                                        preferred_element_type=jnp.float32)
        out_ref[...] = acc


def _round_up(a, m):
    return ((a + m - 1) // m) * m


def _default_tile_target():
    """Per-generation token-tile target (>= ~1 MiB written per step).

    Misdetection is perf-only: every target fits scoped VMEM on all generations.
    """
    try:
        kind = jax.devices()[0].device_kind.lower()
    except Exception:
        return 4096
    if "7" in kind:            # v7x: 3.2 TB/s HBM -> largest tiles
        return 8192
    if "v6" in kind:           # v6e
        return 4096
    return 2048                # v5e / older / unknown


def _choose_tile(n_tok, tm_target, min_steps=8):
    # Small inputs: a single block whose dims equal the full array dims
    # (always legal under the (8,128) rule, no padding anywhere).
    if n_tok <= 1024:
        return n_tok
    # Multi-step: the tile is the lane dim of the index block and the sublane
    # dim of the output block -> keep it a multiple of 128.  Clamp so the grid
    # keeps >= min_steps steps (2 v7x TensorCores x >=4 steps each) but never
    # drop below 512 tokens/step (>= 256 KiB f32 per step).
    cap = _round_up(pl.cdiv(n_tok, min_steps), 128)
    return max(512, min(tm_target, cap))


def _split_table_bf16x3(weight):
    """Exact 3-way bf16 split: w_hi + w_mid + w_lo == weight (f32)."""
    w_hi = weight.astype(jnp.bfloat16)
    r1 = weight - w_hi.astype(jnp.float32)              # exact (Sterbenz)
    w_mid = r1.astype(jnp.bfloat16)
    w_lo = (r1 - w_mid.astype(jnp.float32)).astype(jnp.bfloat16)
    return jnp.stack([w_hi, w_mid, w_lo])               # (3, V, D) bf16


def one_hot_embedding(x, weight, *, tm_target=None, out_dtype=jnp.float32):
    """x: [B, S] int token ids, weight: [V, D] float32 -> [B, S, D] out_dtype."""
    B, S = x.shape
    V, D = weight.shape
    n_tok = B * S

    if tm_target is None:
        tm_target = _default_tile_target()
    tm = _choose_tile(n_tok, tm_target)
    n_steps = pl.cdiv(n_tok, tm)

    # Lane-dense token ids; no padding to a tile multiple and no output slice:
    # Pallas masks the partial last block, so exactly n_tok rows hit HBM.
    idx_row = x.reshape(1, n_tok).astype(jnp.int32)

    w3 = _split_table_bf16x3(weight)                     # (3, V, D) bf16

    is_bf16_out = out_dtype == jnp.bfloat16
    out_bytes = 2 if is_bf16_out else 4
    passes = 1 if is_bf16_out else 3
    cost = pl.CostEstimate(
        flops=2 * n_tok * V * D * passes,
        transcendentals=0,
        bytes_accessed=n_tok * D * out_bytes + n_tok * 4 + 3 * V * D * 2,
    )

    out_flat = pl.pallas_call(
        _embed_kernel,
        out_shape=jax.ShapeDtypeStruct((n_tok, D), out_dtype),
        grid_spec=pltpu.PrefetchScalarGridSpec(
            num_scalar_prefetch=0,
            grid=(n_steps,),
            in_specs=[
                # Token ids: dense lane-major DMA, 4 B/token in VMEM.
                pl.BlockSpec((1, tm), lambda i: (0, i)),
                # Whole (tiny) split table; constant index_map -> copied once.
                # TODO(synk): for large V*D pin it (pl.Buffered(1) / scratch)
                # or use a DMA row-gather instead of a one-hot matmul.
                pl.BlockSpec((3, V, D), lambda i: (0, 0, 0)),
            ],
            out_specs=pl.BlockSpec((tm, D), lambda i: (i, 0)),
        ),
        compiler_params=pltpu.CompilerParams(
            dimension_semantics=("parallel",),
        ),
        cost_estimate=cost,
    )(idx_row, w3)

    return out_flat.reshape(B, S, D)


def init_embedding_weight(key, vocab, dim, pad_idx):
    """Deterministic nn.Embedding-style init (N(0,1)); padding row zeroed."""
    w = jax.random.normal(key, (vocab, dim), dtype=jnp.float32)
    return w.at[pad_idx].set(0.0)


if __name__ == "__main__":
    key = jax.random.PRNGKey(0)
    k_w, k_x, k_x2 = jax.random.split(key, 3)

    weight = init_embedding_weight(k_w, ONE_HOT_ENCODING_LEN, EMBED_DIM, PAD_IDX)

    # 1) Small shape consistent with the module: batch=2, seq=8.
    B, S = 2, 8
    x = jax.random.randint(k_x, (B, S), 0, ONE_HOT_ENCODING_LEN, dtype=jnp.int32)
    x = x.at[0, 0].set(PAD_IDX)
    x = x.at[1, 3].set(PAD_IDX)

    out = jax.block_until_ready(one_hot_embedding(x, weight))
    ref = jnp.take(weight, x, axis=0)
    assert out.shape == (B, S, EMBED_DIM)
    assert jnp.allclose(out, ref, atol=1e-5), "mismatch vs reference gather"
    assert jnp.allclose(out[0, 0], 0.0), "pad token must embed to zeros"

    # 2) Larger, non-tile-multiple token count: multi-step grid + masked
    #    partial last block (no wrapper padding, no output slice/copy).
    B2, S2 = 4, 1000
    x2 = jax.random.randint(k_x2, (B2, S2), 0, ONE_HOT_ENCODING_LEN, dtype=jnp.int32)
    out2 = jax.block_until_ready(one_hot_embedding(x2, weight))
    ref2 = jnp.take(weight, x2, axis=0)
    assert out2.shape == (B2, S2, EMBED_DIM)
    assert jnp.allclose(out2, ref2, atol=1e-5), "mismatch vs reference gather (partial block)"

    # 3) Optional bf16 output path (single MXU pass, half the writeback).
    out_bf16 = jax.block_until_ready(
        one_hot_embedding(x, weight, out_dtype=jnp.bfloat16))
    assert out_bf16.dtype == jnp.bfloat16
    assert jnp.allclose(out_bf16.astype(jnp.float32), ref, atol=2e-2, rtol=2e-2), \
        "bf16 path out of tolerance"

    print("KERNEL_OK")
</pallas_src>

<mosaic_0001>
module attributes {stable_mosaic.version = 11 : i64} {
  func.func @_embed_kernel(%arg0: i32, %arg1: memref<1x16xi32, #tpu.memory_space<vmem>>, %arg2: memref<3x32x128xbf16, #tpu.memory_space<vmem>>, %arg3: memref<16x128xf32, #tpu.memory_space<vmem>>) attributes {dimension_semantics = [#tpu.dimension_semantics<parallel>], iteration_bounds = array<i64: 1>, scalar_prefetch = 0 : i64, scratch_operands = 0 : i64, tpu.core_type = #tpu.core_type<tc>, window_params = [{transform_indices = @transform_0, window_bounds = array<i64: 1, 16>}, {pipeline_mode = #tpu.pipeline_mode<synchronous>, transform_indices = @transform_1, window_bounds = array<i64: 3, 32, 128>}, {transform_indices = @transform_2, window_bounds = array<i64: 16, 128>}]} {
    %c0 = arith.constant 0 : index
    %c0_0 = arith.constant 0 : index
    %0 = vector.load %arg1[%c0, %c0_0] : memref<1x16xi32, #tpu.memory_space<vmem>>, vector<1x16xi32>
    %1 = tpu.iota {dimensions = array<i32: 0>} : vector<32x16xi32>
    %2 = vector.broadcast %0 : vector<1x16xi32> to vector<32x16xi32>
    %3 = arith.cmpi eq, %1, %2 : vector<32x16xi32>
    %4 = arith.extui %3 : vector<32x16xi1> to vector<32x16xi32>
    %5 = arith.sitofp %4 : vector<32x16xi32> to vector<32x16xf32>
    %6 = arith.truncf %5 : vector<32x16xf32> to vector<32x16xbf16>
    %c2 = arith.constant 2 : index
    %c0_1 = arith.constant 0 : index
    %c0_2 = arith.constant 0 : index
    %7 = vector.load %arg2[%c2, %c0_1, %c0_2] : memref<3x32x128xbf16, #tpu.memory_space<vmem>>, vector<1x32x128xbf16>
    %8 = vector.shape_cast %7 : vector<1x32x128xbf16> to vector<32x128xbf16>
    %cst = arith.constant dense<0.000000e+00> : vector<16x128xf32>
    %9 = tpu.matmul %6, %8, %cst {dimension_numbers = #tpu.dot_dimension_numbers<[0], [0], [1], [1], [0, 1, 1, 1], [], []>} : vector<32x16xbf16>, vector<32x128xbf16>, vector<16x128xf32> -> vector<16x128xf32>
    %c1 = arith.constant 1 : index
    %c0_3 = arith.constant 0 : index
    %c0_4 = arith.constant 0 : index
    %10 = vector.load %arg2[%c1, %c0_3, %c0_4] : memref<3x32x128xbf16, #tpu.memory_space<vmem>>, vector<1x32x128xbf16>
    %11 = vector.shape_cast %10 : vector<1x32x128xbf16> to vector<32x128xbf16>
    %cst_5 = arith.constant dense<0.000000e+00> : vector<16x128xf32>
    %12 = tpu.matmul %6, %11, %cst_5 {dimension_numbers = #tpu.dot_dimension_numbers<[0], [0], [1], [1], [0, 1, 1, 1], [], []>} : vector<32x16xbf16>, vector<32x128xbf16>, vector<16x128xf32> -> vector<16x128xf32>
    %13 = arith.addf %9, %12 : vector<16x128xf32>
    %c0_6 = arith.constant 0 : index
    %c0_7 = arith.constant 0 : index
    %c0_8 = arith.constant 0 : index
    %14 = vector.load %arg2[%c0_6, %c0_7, %c0_8] : memref<3x32x128xbf16, #tpu.memory_space<vmem>>, vector<1x32x128xbf16>
    %15 = vector.shape_cast %14 : vector<1x32x128xbf16> to vector<32x128xbf16>
    %cst_9 = arith.constant dense<0.000000e+00> : vector<16x128xf32>
    %16 = tpu.matmul %6, %15, %cst_9 {dimension_numbers = #tpu.dot_dimension_numbers<[0], [0], [1], [1], [0, 1, 1, 1], [], []>} : vector<32x16xbf16>, vector<32x128xbf16>, vector<16x128xf32> -> vector<16x128xf32>
    %17 = arith.addf %13, %16 : vector<16x128xf32>
    %c0_10 = arith.constant 0 : index
    %c0_11 = arith.constant 0 : index
    %18 = vector.load %arg3[%c0_10, %c0_11] : memref<16x128xf32, #tpu.memory_space<vmem>>, vector<16x128xf32>
    tpu.vector_store %arg3[%c0_10, %c0_11], %17 {strides = array<i32>} : memref<16x128xf32, #tpu.memory_space<vmem>>, vector<16x128xf32>,
    return
  }
  func.func @transform_0(%arg0: i32) -> (i32, i32) {
    %c0_i32 = arith.constant 0 : i32
    %c0_i32_0 = arith.constant 0 : i32
    return %c0_i32, %arg0 : i32, i32
  }
  func.func @transform_1(%arg0: i32) -> (i32, i32, i32) {
    %c0_i32 = arith.constant 0 : i32
    %c0_i32_0 = arith.constant 0 : i32
    %c0_i32_1 = arith.constant 0 : i32
    %c0_i32_2 = arith.constant 0 : i32
    return %c0_i32, %c0_i32_0, %c0_i32_1 : i32, i32, i32
  }
  func.func @transform_2(%arg0: i32) -> (i32, i32) {
    %c0_i32 = arith.constant 0 : i32
    %c0_i32_0 = arith.constant 0 : i32
    return %arg0, %c0_i32 : i32, i32
  }
}

</mosaic_0001>

<llo_original>
// kernel: tpu_custom_call.1
$region0: #{tpu_custom_call.1}
  #allocation0 [shape = 'u32[]', space=smem, size = 0x4, offset = 0x4, fixed_abs, tag = 'smem constant byte address 0x4 - core index']
  #allocation1 [shape = 'u32[144,128]{1,0:T(1,128)}', space=vmem, size = 0x12000, scoped, tag = 'internal scratch']
  %s0 = inlined_call_operand.hbm [shape: s32[1,16], index: 0, kind: input, shape index: {}]
  %s1 = inlined_call_operand.hbm [shape: bf16[3,32,128], index: 1, kind: input, shape index: {}]
  %s2 = inlined_call_operand.hbm [shape: f32[16,128], index: 2, kind: output, shape index: {}]
  %s3 = sld [smem:[#allocation0]]
  $region26: #{tpu_custom_call.1} parent=0
    _
  %s5 = ssub.s32 1, %s3
  %s6 = scalar_select 0, %s5, %s3
  $region1: #{tpu_custom_call.1} parent=0
    #allocation2 [shape = 'u8[512]{0}', space=vmem, size = 0x400, scoped, tag = 'input window, operand 0, single buffered']
    #allocation3 [shape = 's32[1]{0}', space=sflag, size = 0x4, scoped, tag = 'scoped memory for tpu_custom_call.1']
    #allocation4 [shape = 's32[1]{0}', space=sflag, size = 0x4, scoped, tag = 'scoped memory for tpu_custom_call.1']
    #allocation5 [shape = 'u8[24576]{0}', space=vmem, size = 0x6000, scoped, tag = 'input window, operand 1, single buffered']
    #allocation6 [shape = 's32[1]{0}', space=sflag, size = 0x4, scoped, tag = 'scoped memory for tpu_custom_call.1']
    #allocation7 [shape = 'u8[8192]{0}', space=vmem, size = 0x2000, scoped, tag = 'output window, operand 0, single buffered']
    %7 = vsyncpa [#allocation3], 0
    %8 = vsyncpa [#allocation6], 0
    %9 = vsyncpa [#allocation4], 0
    // Predicated region
    $region2: #{tpu_custom_call.1} parent=1 // pred_check
      _
    $region3: #{tpu_custom_call.1} parent=1 // pred_check_branch
      %11 = sbr.rel (0) target = $region5
    $region4: #{tpu_custom_call.1} parent=1 // pred_region
      %s13 = ssub.s32 16, 16
      %14 = vsyncadd [#allocation3], %s13
      %s16 = sshll.u32 [#allocation2], 4
      %s17 = int_to_ptr.vmem [resolvable:$true] %s16
      %19 = dma.hbm_to_vmem [thread:$0]  %s0, 16, %s17, [#allocation3]
    $region5: #{tpu_custom_call.1} parent=1 // pred_fallthru
      _
    // Predicated region
    $region6: #{tpu_custom_call.1} parent=1 // pred_check
      _
    $region7: #{tpu_custom_call.1} parent=1 // pred_check_branch
      %21 = sbr.rel (0) target = $region9
    $region8: #{tpu_custom_call.1} parent=1 // pred_region
      %s23 = ssub.s32 768, 768
      %24 = vsyncadd [#allocation6], %s23
      %s25 = sshll.u32 [#allocation5], 4
      %s26 = int_to_ptr.vmem [resolvable:$true] %s25
      %31 = dma.hbm_to_vmem [thread:$0]  %s1, 768, %s26, [#allocation6], 64, 64, 4
    $region9: #{tpu_custom_call.1} parent=1 // pred_fallthru
      _
    // Predicated region
    $region10: #{tpu_custom_call.1} parent=1 // pred_check
      _
    $region11: #{tpu_custom_call.1} parent=1 // pred_check_branch
      %33 = sbr.rel (0) target = $region13
    $region12: #{tpu_custom_call.1} parent=1 // pred_region
      %34 = dma.done [#allocation3], 16
    $region13: #{tpu_custom_call.1} parent=1 // pred_fallthru
      _
    // Predicated region
    $region14: #{tpu_custom_call.1} parent=1 // pred_check
      _
    $region15: #{tpu_custom_call.1} parent=1 // pred_check_branch
      %36 = sbr.rel (0) target = $region17
    $region16: #{tpu_custom_call.1} parent=1 // pred_region
      %37 = dma.done [#allocation6], 768
    $region17: #{tpu_custom_call.1} parent=1 // pred_fallthru
      _
    %v39 = vld [vmem:[#allocation2] sm:$0x1]
    %v40 = vlaneseq
    %v41 = vshrl.u32 %v40, 7
    %v42 = vadd.s32 %v41, 8
    %v43 = vadd.s32 %v41, 16
    %v44 = vadd.s32 %v41, 24
    %v45 = vlaneseq
    %v46 = vshrl.u32 %v45, 7
    %v47 = vsub.s32 0, %v46
    %v48 = vrot.slane %v39, %v47
    %vm49 = vcmp.eq.s32.totalorder %v41, %v48
    %vm50 = vcmp.eq.s32.totalorder %v42, %v48
    %vm51 = vcmp.eq.s32.totalorder %v43, %v48
    %vm52 = vcmp.eq.s32.totalorder %v44, %v48
    %v53 = vsel %vm49, 1, 0
    %v54 = vsel %vm50, 1, 0
    %v55 = vsel %vm51, 1, 0
    %v56 = vsel %vm52, 1, 0
    %v57 = vcvt.s32.f32 %v53
    %v58 = vcvt.s32.f32 %v54
    %v59 = vcvt.s32.f32 %v55
    %v60 = vcvt.s32.f32 %v56
    %v61 = vpack.c.bf16 %v58, %v57
    %v62 = vpack.c.bf16 %v60, %v59
    %s63 = scalar_lea.vmem [#allocation5], 32
    %v64 = vld [vmem:[%s63] sm:$0xf]
    %v65 = vld [vmem:[%s63 + $0x4] sm:$0xf]
    %v66 = vld [vmem:[%s63 + $0x8] sm:$0xf]
    %v67 = vld [vmem:[%s63 + $0xc] sm:$0xf]
    %s68 = scalar_lea.vmem [#allocation5], 16
    %v69 = vld [vmem:[%s68] sm:$0xf]
    %v70 = vld [vmem:[%s68 + $0x4] sm:$0xf]
    %v71 = vld [vmem:[%s68 + $0x8] sm:$0xf]
    %v72 = vld [vmem:[%s68 + $0xc] sm:$0xf]
    %73 = vxpose.xlu0.c.b16.start [1/8] %v61, 128
    %74 = vxpose.xlu0.c.b16.cont [2/8] %v62, 128
    %75 = vxpose.xlu0.c.b16.cont [3/8] 0, 128
    %76 = vxpose.xlu0.c.b16.cont [4/8] 0, 128
    %77 = vxpose.xlu0.c.b16.cont [5/8] 0, 128
    %78 = vxpose.xlu0.c.b16.cont [6/8] 0, 128
    %79 = vxpose.xlu0.c.b16.cont [7/8] 0, 128
    %80 = vxpose.xlu0.c.b16.end [8/8] 0, 128
    %v81 = vpop.trf.xlu0
    %v82 = vpop.trf.xlu0
    %v83 = vpop.trf.xlu0
    %v84 = vpop.trf.xlu0
    %v85 = vpop.trf.xlu0
    %v86 = vpop.trf.xlu0
    %v87 = vpop.trf.xlu0
    %v88 = vpop.trf.xlu0
    %v93 = vunpack.c.l.b16 %v69
    %v94 = vunpack.c.l.b16 %v70
    %v95 = vunpack.c.l.b16 %v71
    %v96 = vunpack.c.l.b16 %v72
    %v97 = vpack.c.b16 %v94, %v93
    %v98 = vpack.c.b16 %v96, %v95
    %vm101 = vcmask 261120
    %v103 = vsel %vm101, %v81, 0
    %105 = vmatprep.subr.bf16.mxu0 0
    %106 = vmatpush1.bf16.msra.mxu0 %v97
    %107 = vmatprep.subr.bf16.mxu0 0
    %108 = vmatpush1.bf16.msra.mxu0 %v98
    %109 = vmatprep.subr.bf16.mxu0 0
    %110 = vmatpush1.bf16.msra.mxu0 0
    %111 = vmatprep.subr.bf16.mxu0 0
    %112 = vmatpush1.bf16.msra.mxu0 0
    %113 = vmatprep.subr.bf16.mxu0 0
    %114 = vmatpush1.bf16.msra.mxu0 0
    %115 = vmatprep.subr.bf16.mxu0 0
    %116 = vmatpush1.bf16.msra.mxu0 0
    %117 = vmatprep.subr.bf16.mxu0 0
    %118 = vmatpush1.bf16.msra.mxu0 0
    %119 = vmatprep.subr.bf16.mxu0 0
    %120 = vmatpush1.bf16.msra.mxu0 0
    %121 = vmatprep.subr.bf16.mxu0 0
    %122 = vmatpush1.bf16.msra.mxu0 0
    %123 = vmatprep.subr.bf16.mxu0 0
    %124 = vmatpush1.bf16.msra.mxu0 0
    %125 = vmatprep.subr.bf16.mxu0 0
    %126 = vmatpush1.bf16.msra.mxu0 0
    %127 = vmatprep.subr.bf16.mxu0 0
    %128 = vmatpush1.bf16.msra.mxu0 0
    %129 = vmatprep.subr.bf16.mxu0 0
    %130 = vmatpush1.bf16.msra.mxu0 0
    %131 = vmatprep.subr.bf16.mxu0 0
    %132 = vmatpush1.bf16.msra.mxu0 0
    %133 = vmatprep.subr.bf16.mxu0 0
    %134 = vmatpush1.bf16.msra.mxu0 0
    %135 = vmatprep.subr.bf16.mxu0 0
    %136 = vmatpush1.bf16.msra.mxu0 0
    %137 = vmatprep.mubr.bf16.mxu0 0
    %138 = vmatmul.mubr.bf16.gmra.mrb[0].mxu0 %v103
    %v139 = vpop.f32.mrb[0].mxu0
    %v140 = vadd.f32 0.0, %v139
    %v141 = vpop.f32.mrb[0].mxu0
    %v142 = vpop.f32.mrb[0].mxu0
    %v143 = vadd.f32 0.0, %v142
    %v144 = vpop.f32.mrb[0].mxu0
    %145 = vdwg.mxu0
    %v150 = vunpack.c.l.b16 %v64
    %v151 = vunpack.c.l.b16 %v65
    %v152 = vunpack.c.l.b16 %v66
    %v153 = vunpack.c.l.b16 %v67
    %v154 = vpack.c.b16 %v151, %v150
    %v155 = vpack.c.b16 %v153, %v152
    %158 = vmatprep.subr.bf16.mxu0 0
    %159 = vmatpush1.bf16.msra.mxu0 %v154
    %160 = vmatprep.subr.bf16.mxu0 0
    %161 = vmatpush1.bf16.msra.mxu0 %v155
    %162 = vmatprep.subr.bf16.mxu0 0
    %163 = vmatpush1.bf16.msra.mxu0 0
    %164 = vmatprep.subr.bf16.mxu0 0
    %165 = vmatpush1.bf16.msra.mxu0 0
    %166 = vmatprep.subr.bf16.mxu0 0
    %167 = vmatpush1.bf16.msra.mxu0 0
    %168 = vmatprep.subr.bf16.mxu0 0
    %169 = vmatpush1.bf16.msra.mxu0 0
    %170 = vmatprep.subr.bf16.mxu0 0
    %171 = vmatpush1.bf16.msra.mxu0 0
    %172 = vmatprep.subr.bf16.mxu0 0
    %173 = vmatpush1.bf16.msra.mxu0 0
    %174 = vmatprep.subr.bf16.mxu0 0
    %175 = vmatpush1.bf16.msra.mxu0 0
    %176 = vmatprep.subr.bf16.mxu0 0
    %177 = vmatpush1.bf16.msra.mxu0 0
    %178 = vmatprep.subr.bf16.mxu0 0
    %179 = vmatpush1.bf16.msra.mxu0 0
    %180 = vmatprep.subr.bf16.mxu0 0
    %181 = vmatpush1.bf16.msra.mxu0 0
    %182 = vmatprep.subr.bf16.mxu0 0
    %183 = vmatpush1.bf16.msra.mxu0 0
    %184 = vmatprep.subr.bf16.mxu0 0
    %185 = vmatpush1.bf16.msra.mxu0 0
    %186 = vmatprep.subr.bf16.mxu0 0
    %187 = vmatpush1.bf16.msra.mxu0 0
    %188 = vmatprep.subr.bf16.mxu0 0
    %189 = vmatpush1.bf16.msra.mxu0 0
    %190 = vmatprep.mubr.bf16.mxu0 0
    %191 = vmatmul.mubr.bf16.gmra.mrb[0].mxu0 %v103
    %v192 = vpop.f32.mrb[0].mxu0
    %v193 = vadd.f32 %v140, %v192
    %v194 = vpop.f32.mrb[0].mxu0
    %v195 = vpop.f32.mrb[0].mxu0
    %v196 = vadd.f32 %v143, %v195
    %v197 = vpop.f32.mrb[0].mxu0
    %198 = vdwg.mxu0
    %v199 = vld [vmem:[#allocation5] sm:$0xf]
    %v200 = vld [vmem:[#allocation5 + $0x4] sm:$0xf]
    %v201 = vld [vmem:[#allocation5 + $0x8] sm:$0xf]
    %v202 = vld [vmem:[#allocation5 + $0xc] sm:$0xf]
    %v207 = vunpack.c.l.b16 %v199
    %v208 = vunpack.c.l.b16 %v200
    %v209 = vunpack.c.l.b16 %v201
    %v210 = vunpack.c.l.b16 %v202
    %v211 = vpack.c.b16 %v208, %v207
    %v212 = vpack.c.b16 %v210, %v209
    %215 = vmatprep.subr.bf16.mxu0 0
    %216 = vmatpush1.bf16.msra.mxu0 %v211
    %217 = vmatprep.subr.bf16.mxu0 0
    %218 = vmatpush1.bf16.msra.mxu0 %v212
    %219 = vmatprep.subr.bf16.mxu0 0
    %220 = vmatpush1.bf16.msra.mxu0 0
    %221 = vmatprep.subr.bf16.mxu0 0
    %222 = vmatpush1.bf16.msra.mxu0 0
    %223 = vmatprep.subr.bf16.mxu0 0
    %224 = vmatpush1.bf16.msra.mxu0 0
    %225 = vmatprep.subr.bf16.mxu0 0
    %226 = vmatpush1.bf16.msra.mxu0 0
    %227 = vmatprep.subr.bf16.mxu0 0
    %228 = vmatpush1.bf16.msra.mxu0 0
    %229 = vmatprep.subr.bf16.mxu0 0
    %230 = vmatpush1.bf16.msra.mxu0 0
    %231 = vmatprep.subr.bf16.mxu0 0
    %232 = vmatpush1.bf16.msra.mxu0 0
    %233 = vmatprep.subr.bf16.mxu0 0
    %234 = vmatpush1.bf16.msra.mxu0 0
    %235 = vmatprep.subr.bf16.mxu0 0
    %236 = vmatpush1.bf16.msra.mxu0 0
    %237 = vmatprep.subr.bf16.mxu0 0
    %238 = vmatpush1.bf16.msra.mxu0 0
    %239 = vmatprep.subr.bf16.mxu0 0
    %240 = vmatpush1.bf16.msra.mxu0 0
    %241 = vmatprep.subr.bf16.mxu0 0
    %242 = vmatpush1.bf16.msra.mxu0 0
    %243 = vmatprep.subr.bf16.mxu0 0
    %244 = vmatpush1.bf16.msra.mxu0 0
    %245 = vmatprep.subr.bf16.mxu0 0
    %246 = vmatpush1.bf16.msra.mxu0 0
    %247 = vmatprep.mubr.bf16.mxu0 0
    %248 = vmatmul.mubr.bf16.gmra.mrb[0].mxu0 %v103
    %v249 = vpop.f32.mrb[0].mxu0
    %v250 = vadd.f32 0.0, %v249
    %v251 = vpop.f32.mrb[0].mxu0
    %v252 = vpop.f32.mrb[0].mxu0
    %v253 = vadd.f32 0.0, %v252
    %v254 = vpop.f32.mrb[0].mxu0
    %255 = vdwg.mxu0
    %v256 = vadd.f32 %v193, %v250
    %v257 = vadd.f32 %v196, %v253
    %258 = vst [vmem:[#allocation7] sm:$0xff] %v256
    %259 = vst [vmem:[#allocation7 + $0x8] sm:$0xff] %v257
    // Predicated region
    $region18: #{tpu_custom_call.1} parent=1 // pred_check
      _
    $region19: #{tpu_custom_call.1} parent=1 // pred_check_branch
      %261 = sbr.rel (0) target = $region21
    $region20: #{tpu_custom_call.1} parent=1 // pred_region
      %s263 = ssub.s32 256, 256
      %264 = vsyncadd [#allocation4], %s263
      %s265 = sshll.u32 [#allocation7], 4
      %s266 = int_to_ptr.vmem [resolvable:$true] %s265
      %271 = dma.vmem_to_hbm [thread:$0]  %s266, 256, %s2, [#allocation4], 128, 128, 8
    $region21: #{tpu_custom_call.1} parent=1 // pred_fallthru
      _
    // Predicated region
    $region22: #{tpu_custom_call.1} parent=1 // pred_check
      _
    $region23: #{tpu_custom_call.1} parent=1 // pred_check_branch
      %273 = sbr.rel (0) target = $region25
    $region24: #{tpu_custom_call.1} parent=1 // pred_region
      %274 = dma.done [#allocation4], 256
    $region25: #{tpu_custom_call.1} parent=1 // pred_fallthru
      _
    %275 = vsyncpa [#allocation3], 1
    %276 = vsyncpa [#allocation6], 1
    %277 = vsyncpa [#allocation4], 1

</llo_original>
